<compile_context>
chip_gen: v6e
topology: v6e:2x2x1
jax: 0.10.0
libtpu: 0.0.40
codegen_flags: <defaults>
</compile_context>

<pallas_src>
import jax
import jax.numpy as jnp
from jax.experimental import pallas as pl
from jax.experimental.pallas import tpu as pltpu

LOG_SIG_MAX = 2.0
LOG_SIG_MIN = -20.0
HIDDEN = 256      # build_mlp hardcodes [256, 256, 256]
LANE = 128


def _round_up(x, m):
    return ((x + m - 1) // m) * m


def gaussian_policy_kernel(state_ref,
                           w1_ref, b1_ref,
                           w2_ref, b2_ref,
                           w3_ref, b3_ref,
                           wh_ref, bh_ref,
                           mean_ref, logstd_ref):
    cdt = w1_ref.dtype            # MXU input dtype (bf16)

    # Hoist bias loads once per invocation (biases stay f32 for the accumulate).
    b1 = b1_ref[...]
    b2 = b2_ref[...]
    b3 = b3_ref[...]
    bh = bh_ref[...]

    x = state_ref[...].astype(cdt)

    # policy_net: Linear -> ReLU -> Linear -> ReLU -> Linear (no activation on last)
    h = jnp.dot(x, w1_ref[...], preferred_element_type=jnp.float32) + b1
    h = jnp.maximum(h, 0.0).astype(cdt)          # ReLU in f32, cast for next MXU op
    h = jnp.dot(h, w2_ref[...], preferred_element_type=jnp.float32) + b2
    h = jnp.maximum(h, 0.0).astype(cdt)
    h = jnp.dot(h, w3_ref[...], preferred_element_type=jnp.float32) + b3
    h = h.astype(cdt)

    # Fused mean / log_std head: one lane-dense (TB, 2*HP) matmul, then split.
    heads = jnp.dot(h, wh_ref[...], preferred_element_type=jnp.float32) + bh
    hp = mean_ref.shape[-1]
    mean = heads[:, :hp]
    log_std = jnp.clip(heads[:, hp:], LOG_SIG_MIN, LOG_SIG_MAX)

    mean_ref[...] = mean.astype(mean_ref.dtype)
    logstd_ref[...] = log_std.astype(logstd_ref.dtype)


def gaussian_policy_forward(state, kparams, *, tb_max=512):
    """state: [B, num_inputs] f32 -> (mean [B, A], log_std [B, A]) f32."""
    B, num_inputs = state.shape
    A = kparams["num_actions"]
    HP = kparams["wh"].shape[1] // 2

    # Batch tile: multiple of 128 (MXU M dim / sublane friendly), capped at tb_max.
    TB = min(tb_max, _round_up(max(B, 1), LANE))
    B_pad = _round_up(B, TB)
    if B_pad != B:
        state = jnp.pad(state, ((0, B_pad - B), (0, 0)))

    grid = (B_pad // TB,)
    batch_map = lambda i: (i, 0)
    const_map = lambda i: (0, 0)

    args = (state,
            kparams["w1"], kparams["b1"],
            kparams["w2"], kparams["b2"],
            kparams["w3"], kparams["b3"],
            kparams["wh"], kparams["bh"])

    in_specs = [pl.BlockSpec((TB, num_inputs), batch_map)]
    in_specs += [pl.BlockSpec(a.shape, const_map) for a in args[1:]]
    out_specs = (pl.BlockSpec((TB, HP), batch_map),
                 pl.BlockSpec((TB, HP), batch_map))

    weight_bytes = sum(int(a.size) * int(a.dtype.itemsize) for a in args[1:])
    flops = 2 * B_pad * (num_inputs * HIDDEN + 2 * HIDDEN * HIDDEN + HIDDEN * 2 * HP)
    bytes_accessed = (B_pad * num_inputs * int(state.dtype.itemsize)
                      + weight_bytes
                      + 2 * B_pad * HP * 4)

    mean_pad, logstd_pad = pl.pallas_call(
        gaussian_policy_kernel,
        grid=grid,
        out_shape=(jax.ShapeDtypeStruct((B_pad, HP), jnp.float32),
                   jax.ShapeDtypeStruct((B_pad, HP), jnp.float32)),
        in_specs=in_specs,
        out_specs=out_specs,
        compiler_params=pltpu.CompilerParams(
            dimension_semantics=("parallel",),
            vmem_limit_bytes=32 * 1024 * 1024),
        cost_estimate=pl.CostEstimate(flops=int(flops),
                                      transcendentals=0,
                                      bytes_accessed=int(bytes_accessed)),
    )(*args)

    return mean_pad[:B, :A], logstd_pad[:B, :A]


def xavier_uniform(key, fan_in, fan_out, gain=1.0):
    bound = gain * (6.0 / (fan_in + fan_out)) ** 0.5
    # stored as [in, out] (transposed vs. torch Linear [out, in]) so y = x @ W + b
    return jax.random.uniform(key, (fan_in, fan_out), jnp.float32, -bound, bound)


def init_params(key, num_inputs, num_actions):
    ks = jax.random.split(key, 5)
    return {
        "w1": xavier_uniform(ks[0], num_inputs, HIDDEN),
        "b1": jnp.zeros((1, HIDDEN), jnp.float32),
        "w2": xavier_uniform(ks[1], HIDDEN, HIDDEN),
        "b2": jnp.zeros((1, HIDDEN), jnp.float32),
        "w3": xavier_uniform(ks[2], HIDDEN, HIDDEN),
        "b3": jnp.zeros((1, HIDDEN), jnp.float32),
        "wm": xavier_uniform(ks[3], HIDDEN, num_actions),
        "bm": jnp.zeros((1, num_actions), jnp.float32),
        "ws": xavier_uniform(ks[4], HIDDEN, num_actions),
        "bs": jnp.zeros((1, num_actions), jnp.float32),
    }


def prepare_kernel_params(p, num_actions, compute_dtype=jnp.bfloat16):
    """Cast weights to the MXU input dtype and fuse+pad the two heads into one
    lane-dense [HIDDEN, 2*HP] weight (mean in cols [0:A], log_std in [HP:HP+A])."""
    A = num_actions
    HP = _round_up(A, LANE)
    wh = jnp.zeros((HIDDEN, 2 * HP), jnp.float32)
    wh = wh.at[:, :A].set(p["wm"]).at[:, HP:HP + A].set(p["ws"])
    bh = jnp.zeros((1, 2 * HP), jnp.float32)
    bh = bh.at[:, :A].set(p["bm"]).at[:, HP:HP + A].set(p["bs"])
    return {
        "num_actions": A,
        "w1": p["w1"].astype(compute_dtype), "b1": p["b1"],
        "w2": p["w2"].astype(compute_dtype), "b2": p["b2"],
        "w3": p["w3"].astype(compute_dtype), "b3": p["b3"],
        "wh": wh.astype(compute_dtype), "bh": bh,
    }


def reference_forward(state, p):
    h = jnp.maximum(state @ p["w1"] + p["b1"], 0.0)
    h = jnp.maximum(h @ p["w2"] + p["b2"], 0.0)
    h = h @ p["w3"] + p["b3"]
    mean = h @ p["wm"] + p["bm"]
    log_std = jnp.clip(h @ p["ws"] + p["bs"], LOG_SIG_MIN, LOG_SIG_MAX)
    return mean, log_std


if __name__ == "__main__":
    key = jax.random.PRNGKey(0)
    k_param, k_state = jax.random.split(key)

    B, num_inputs, num_actions = 2, 8, 4
    params = init_params(k_param, num_inputs, num_actions)
    kparams = prepare_kernel_params(params, num_actions)
    state = jax.random.normal(k_state, (B, num_inputs), jnp.float32)

    mean, log_std = gaussian_policy_forward(state, kparams)
    jax.block_until_ready((mean, log_std))

    ref_mean, ref_log_std = reference_forward(state, params)
    assert mean.shape == (B, num_actions) and log_std.shape == (B, num_actions)
    # Kernel uses bf16 MXU inputs (f32 accumulation) vs. an f32 reference -> loose tol.
    assert jnp.allclose(mean, ref_mean, atol=5e-2, rtol=5e-2)
    assert jnp.allclose(log_std, ref_log_std, atol=5e-2, rtol=5e-2)

    # TODO(synk): sample() (Normal.rsample + tanh squash + log_prob, action_scale/bias)
    # is host-side RNG sampling outside forward(); could be added with
    # pltpu.prng_seed/prng_random_bits if needed.
    print("KERNEL_OK")
</pallas_src>

<mosaic_0001>
module attributes {stable_mosaic.version = 11 : i64} {
  func.func @gaussian_policy_kernel(%arg0: i32, %arg1: memref<128x8xf32, #tpu.memory_space<vmem>>, %arg2: memref<8x256xbf16, #tpu.memory_space<vmem>>, %arg3: memref<1x256xf32, #tpu.memory_space<vmem>>, %arg4: memref<256x256xbf16, #tpu.memory_space<vmem>>, %arg5: memref<1x256xf32, #tpu.memory_space<vmem>>, %arg6: memref<256x256xbf16, #tpu.memory_space<vmem>>, %arg7: memref<1x256xf32, #tpu.memory_space<vmem>>, %arg8: memref<256x256xbf16, #tpu.memory_space<vmem>>, %arg9: memref<1x256xf32, #tpu.memory_space<vmem>>, %arg10: memref<128x128xf32, #tpu.memory_space<vmem>>, %arg11: memref<128x128xf32, #tpu.memory_space<vmem>>) attributes {dimension_semantics = [#tpu.dimension_semantics<parallel>], iteration_bounds = array<i64: 1>, scalar_prefetch = 0 : i64, scratch_operands = 0 : i64, tpu.core_type = #tpu.core_type<tc>, window_params = [{transform_indices = @transform_0, window_bounds = array<i64: 128, 8>}, {pipeline_mode = #tpu.pipeline_mode<synchronous>, transform_indices = @transform_1, window_bounds = array<i64: 8, 256>}, {pipeline_mode = #tpu.pipeline_mode<synchronous>, transform_indices = @transform_2, window_bounds = array<i64: 1, 256>}, {pipeline_mode = #tpu.pipeline_mode<synchronous>, transform_indices = @transform_3, window_bounds = array<i64: 256, 256>}, {pipeline_mode = #tpu.pipeline_mode<synchronous>, transform_indices = @transform_4, window_bounds = array<i64: 1, 256>}, {pipeline_mode = #tpu.pipeline_mode<synchronous>, transform_indices = @transform_5, window_bounds = array<i64: 256, 256>}, {pipeline_mode = #tpu.pipeline_mode<synchronous>, transform_indices = @transform_6, window_bounds = array<i64: 1, 256>}, {pipeline_mode = #tpu.pipeline_mode<synchronous>, transform_indices = @transform_7, window_bounds = array<i64: 256, 256>}, {pipeline_mode = #tpu.pipeline_mode<synchronous>, transform_indices = @transform_8, window_bounds = array<i64: 1, 256>}, {transform_indices = @transform_9, window_bounds = array<i64: 128, 128>}, {transform_indices = @transform_10, window_bounds = array<i64: 128, 128>}]} {
    %c0 = arith.constant 0 : index
    %c0_0 = arith.constant 0 : index
    %0 = vector.load %arg3[%c0, %c0_0] : memref<1x256xf32, #tpu.memory_space<vmem>>, vector<1x256xf32>
    %c0_1 = arith.constant 0 : index
    %c0_2 = arith.constant 0 : index
    %1 = vector.load %arg5[%c0_1, %c0_2] : memref<1x256xf32, #tpu.memory_space<vmem>>, vector<1x256xf32>
    %c0_3 = arith.constant 0 : index
    %c0_4 = arith.constant 0 : index
    %2 = vector.load %arg7[%c0_3, %c0_4] : memref<1x256xf32, #tpu.memory_space<vmem>>, vector<1x256xf32>
    %c0_5 = arith.constant 0 : index
    %c0_6 = arith.constant 0 : index
    %3 = vector.load %arg9[%c0_5, %c0_6] : memref<1x256xf32, #tpu.memory_space<vmem>>, vector<1x256xf32>
    %c0_7 = arith.constant 0 : index
    %c0_8 = arith.constant 0 : index
    %4 = vector.load %arg1[%c0_7, %c0_8] : memref<128x8xf32, #tpu.memory_space<vmem>>, vector<128x8xf32>
    %5 = arith.truncf %4 : vector<128x8xf32> to vector<128x8xbf16>
    %c0_9 = arith.constant 0 : index
    %c0_10 = arith.constant 0 : index
    %6 = vector.load %arg2[%c0_9, %c0_10] : memref<8x256xbf16, #tpu.memory_space<vmem>>, vector<8x256xbf16>
    %cst = arith.constant dense<0.000000e+00> : vector<128x256xf32>
    %7 = tpu.matmul %5, %6, %cst {dimension_numbers = #tpu.dot_dimension_numbers<[1], [0], [0], [1], [0, 0, 1, 1], [], []>} : vector<128x8xbf16>, vector<8x256xbf16>, vector<128x256xf32> -> vector<128x256xf32>
    %8 = vector.broadcast %0 : vector<1x256xf32> to vector<128x256xf32>
    %9 = arith.addf %7, %8 : vector<128x256xf32>
    %cst_11 = arith.constant 0.000000e+00 : f32
    %10 = vector.broadcast %cst_11 : f32 to vector<128x256xf32>
    %11 = arith.maximumf %9, %10 : vector<128x256xf32>
    %12 = arith.truncf %11 : vector<128x256xf32> to vector<128x256xbf16>
    %c0_12 = arith.constant 0 : index
    %c0_13 = arith.constant 0 : index
    %13 = vector.load %arg4[%c0_12, %c0_13] : memref<256x256xbf16, #tpu.memory_space<vmem>>, vector<256x256xbf16>
    %cst_14 = arith.constant dense<0.000000e+00> : vector<128x256xf32>
    %14 = tpu.matmul %12, %13, %cst_14 {dimension_numbers = #tpu.dot_dimension_numbers<[1], [0], [0], [1], [0, 0, 1, 1], [], []>} : vector<128x256xbf16>, vector<256x256xbf16>, vector<128x256xf32> -> vector<128x256xf32>
    %15 = vector.broadcast %1 : vector<1x256xf32> to vector<128x256xf32>
    %16 = arith.addf %14, %15 : vector<128x256xf32>
    %cst_15 = arith.constant 0.000000e+00 : f32
    %17 = vector.broadcast %cst_15 : f32 to vector<128x256xf32>
    %18 = arith.maximumf %16, %17 : vector<128x256xf32>
    %19 = arith.truncf %18 : vector<128x256xf32> to vector<128x256xbf16>
    %c0_16 = arith.constant 0 : index
    %c0_17 = arith.constant 0 : index
    %20 = vector.load %arg6[%c0_16, %c0_17] : memref<256x256xbf16, #tpu.memory_space<vmem>>, vector<256x256xbf16>
    %cst_18 = arith.constant dense<0.000000e+00> : vector<128x256xf32>
    %21 = tpu.matmul %19, %20, %cst_18 {dimension_numbers = #tpu.dot_dimension_numbers<[1], [0], [0], [1], [0, 0, 1, 1], [], []>} : vector<128x256xbf16>, vector<256x256xbf16>, vector<128x256xf32> -> vector<128x256xf32>
    %22 = vector.broadcast %2 : vector<1x256xf32> to vector<128x256xf32>
    %23 = arith.addf %21, %22 : vector<128x256xf32>
    %24 = arith.truncf %23 : vector<128x256xf32> to vector<128x256xbf16>
    %c0_19 = arith.constant 0 : index
    %c0_20 = arith.constant 0 : index
    %25 = vector.load %arg8[%c0_19, %c0_20] : memref<256x256xbf16, #tpu.memory_space<vmem>>, vector<256x256xbf16>
    %cst_21 = arith.constant dense<0.000000e+00> : vector<128x256xf32>
    %26 = tpu.matmul %24, %25, %cst_21 {dimension_numbers = #tpu.dot_dimension_numbers<[1], [0], [0], [1], [0, 0, 1, 1], [], []>} : vector<128x256xbf16>, vector<256x256xbf16>, vector<128x256xf32> -> vector<128x256xf32>
    %27 = vector.broadcast %3 : vector<1x256xf32> to vector<128x256xf32>
    %28 = arith.addf %26, %27 : vector<128x256xf32>
    %29 = vector.extract_strided_slice %28 {offsets = [0, 0], sizes = [128, 128], strides = [1, 1]} : vector<128x256xf32> to vector<128x128xf32>
    %30 = vector.extract_strided_slice %28 {offsets = [0, 128], sizes = [128, 128], strides = [1, 1]} : vector<128x256xf32> to vector<128x128xf32>
    %cst_22 = arith.constant -2.000000e+01 : f32
    %cst_23 = arith.constant 2.000000e+00 : f32
    %31 = vector.broadcast %cst_22 : f32 to vector<128x128xf32>
    %32 = arith.maximumf %31, %30 : vector<128x128xf32>
    %33 = vector.broadcast %cst_23 : f32 to vector<128x128xf32>
    %34 = arith.minimumf %33, %32 : vector<128x128xf32>
    %c0_24 = arith.constant 0 : index
    %c0_25 = arith.constant 0 : index
    %35 = vector.load %arg10[%c0_24, %c0_25] : memref<128x128xf32, #tpu.memory_space<vmem>>, vector<128x128xf32>
    tpu.vector_store %arg10[%c0_24, %c0_25], %29 {strides = array<i32>} : memref<128x128xf32, #tpu.memory_space<vmem>>, vector<128x128xf32>,
    %c0_26 = arith.constant 0 : index
    %c0_27 = arith.constant 0 : index
    %36 = vector.load %arg11[%c0_26, %c0_27] : memref<128x128xf32, #tpu.memory_space<vmem>>, vector<128x128xf32>
    tpu.vector_store %arg11[%c0_26, %c0_27], %34 {strides = array<i32>} : memref<128x128xf32, #tpu.memory_space<vmem>>, vector<128x128xf32>,
    return
  }
  func.func @transform_0(%arg0: i32) -> (i32, i32) {
    %c0_i32 = arith.constant 0 : i32
    %c0_i32_0 = arith.constant 0 : i32
    return %arg0, %c0_i32 : i32, i32
  }
  func.func @transform_1(%arg0: i32) -> (i32, i32) {
    %c0_i32 = arith.constant 0 : i32
    %c0_i32_0 = arith.constant 0 : i32
    %c0_i32_1 = arith.constant 0 : i32
    return %c0_i32, %c0_i32_0 : i32, i32
  }
  func.func @transform_2(%arg0: i32) -> (i32, i32) {
    %c0_i32 = arith.constant 0 : i32
    %c0_i32_0 = arith.constant 0 : i32
    %c0_i32_1 = arith.constant 0 : i32
    return %c0_i32, %c0_i32_0 : i32, i32
  }
  func.func @transform_3(%arg0: i32) -> (i32, i32) {
    %c0_i32 = arith.constant 0 : i32
    %c0_i32_0 = arith.constant 0 : i32
    %c0_i32_1 = arith.constant 0 : i32
    return %c0_i32, %c0_i32_0 : i32, i32
  }
  func.func @transform_4(%arg0: i32) -> (i32, i32) {
    %c0_i32 = arith.constant 0 : i32
    %c0_i32_0 = arith.constant 0 : i32
    %c0_i32_1 = arith.constant 0 : i32
    return %c0_i32, %c0_i32_0 : i32, i32
  }
  func.func @transform_5(%arg0: i32) -> (i32, i32) {
    %c0_i32 = arith.constant 0 : i32
    %c0_i32_0 = arith.constant 0 : i32
    %c0_i32_1 = arith.constant 0 : i32
    return %c0_i32, %c0_i32_0 : i32, i32
  }
  func.func @transform_6(%arg0: i32) -> (i32, i32) {
    %c0_i32 = arith.constant 0 : i32
    %c0_i32_0 = arith.constant 0 : i32
    %c0_i32_1 = arith.constant 0 : i32
    return %c0_i32, %c0_i32_0 : i32, i32
  }
  func.func @transform_7(%arg0: i32) -> (i32, i32) {
    %c0_i32 = arith.constant 0 : i32
    %c0_i32_0 = arith.constant 0 : i32
    %c0_i32_1 = arith.constant 0 : i32
    return %c0_i32, %c0_i32_0 : i32, i32
  }
  func.func @transform_8(%arg0: i32) -> (i32, i32) {
    %c0_i32 = arith.constant 0 : i32
    %c0_i32_0 = arith.constant 0 : i32
    %c0_i32_1 = arith.constant 0 : i32
    return %c0_i32, %c0_i32_0 : i32, i32
  }
  func.func @transform_9(%arg0: i32) -> (i32, i32) {
    %c0_i32 = arith.constant 0 : i32
    %c0_i32_0 = arith.constant 0 : i32
    return %arg0, %c0_i32 : i32, i32
  }
  func.func @transform_10(%arg0: i32) -> (i32, i32) {
    %c0_i32 = arith.constant 0 : i32
    %c0_i32_0 = arith.constant 0 : i32
    return %arg0, %c0_i32 : i32, i32
  }
}

</mosaic_0001>

<llo_original>
// kernel: tpu_custom_call.1
$region0: #{tpu_custom_call.1}
  #allocation0 [shape = 'u32[]', space=smem, size = 0x4, offset = 0x4, fixed_abs, tag = 'smem constant byte address 0x4 - core index']
  #allocation1 [shape = 'u32[144,128]{1,0:T(1,128)}', space=vmem, size = 0x12000, scoped, tag = 'internal scratch']
  %s0 = inlined_call_operand.vmem [shape: f32[128,8], index: 0, kind: input, shape index: {}]
  %s1 = inlined_call_operand.vmem [shape: bf16[8,256], index: 1, kind: input, shape index: {}]
  %s2 = inlined_call_operand.vmem [shape: f32[1,256], index: 2, kind: input, shape index: {}]
  %s3 = inlined_call_operand.hbm [shape: bf16[256,256], index: 3, kind: input, shape index: {}]
  %s4 = inlined_call_operand.vmem [shape: f32[1,256], index: 4, kind: input, shape index: {}]
  %s5 = inlined_call_operand.hbm [shape: bf16[256,256], index: 5, kind: input, shape index: {}]
  %s6 = inlined_call_operand.vmem [shape: f32[1,256], index: 6, kind: input, shape index: {}]
  %s7 = inlined_call_operand.hbm [shape: bf16[256,256], index: 7, kind: input, shape index: {}]
  %s8 = inlined_call_operand.vmem [shape: f32[1,256], index: 8, kind: input, shape index: {}]
  %s9 = inlined_call_operand.hbm [shape: f32[128,128], index: 9, kind: output, shape index: {0}]
  %s10 = inlined_call_operand.hbm [shape: f32[128,128], index: 10, kind: output, shape index: {1}]
  %11 = xla_tuple %s9, %s10
  %s12 = sld [smem:[#allocation0]]
  $region66: #{tpu_custom_call.1} parent=0
    _
  %s14 = ssub.s32 1, %s12
  %s15 = scalar_select 0, %s14, %s12
  $region1: #{tpu_custom_call.1} parent=0
    #allocation2 [shape = 'u8[131072]{0}', space=vmem, size = 0x20000, scoped, tag = 'input window, operand 3, single buffered']
    #allocation3 [shape = 's32[1]{0}', space=sflag, size = 0x4, scoped, tag = 'scoped memory for tpu_custom_call.1']
    #allocation4 [shape = 's32[1]{0}', space=sflag, size = 0x4, scoped, tag = 'scoped memory for tpu_custom_call.1']
    #allocation5 [shape = 'u8[131072]{0}', space=vmem, size = 0x20000, scoped, tag = 'input window, operand 5, single buffered']
    #allocation6 [shape = 's32[1]{0}', space=sflag, size = 0x4, scoped, tag = 'scoped memory for tpu_custom_call.1']
    #allocation7 [shape = 'u8[131072]{0}', space=vmem, size = 0x20000, scoped, tag = 'input window, operand 7, single buffered']
    #allocation8 [shape = 'u8[65536]{0}', space=vmem, size = 0x10000, scoped, tag = 'output window, operand 0, single buffered']
    #allocation9 [shape = 'u8[65536]{0}', space=vmem, size = 0x10000, scoped, tag = 'output window, operand 1, single buffered']
    #allocation10 [shape = 's32[1]{0}', space=sflag, size = 0x4, scoped, tag = 'scoped memory for tpu_custom_call.1']
    %16 = vsyncpa [#allocation3], 0
    %17 = vsyncpa [#allocation6], 0
    %18 = vsyncpa [#allocation4], 0
    %19 = vsyncpa [#allocation10], 0
    // Predicated region
    $region2: #{tpu_custom_call.1} parent=1 // pred_check
      _
    $region3: #{tpu_custom_call.1} parent=1 // pred_check_branch
      %21 = sbr.rel (0) target = $region5
    $region4: #{tpu_custom_call.1} parent=1 // pred_region
      _
    $region5: #{tpu_custom_call.1} parent=1 // pred_fallthru
      _
    // Predicated region
    $region6: #{tpu_custom_call.1} parent=1 // pred_check
      _
    $region7: #{tpu_custom_call.1} parent=1 // pred_check_branch
      %23 = sbr.rel (0) target = $region9
    $region8: #{tpu_custom_call.1} parent=1 // pred_region
      _
    $region9: #{tpu_custom_call.1} parent=1 // pred_fallthru
      _
    // Predicated region
    $region10: #{tpu_custom_call.1} parent=1 // pred_check
      _
    $region11: #{tpu_custom_call.1} parent=1 // pred_check_branch
      %25 = sbr.rel (0) target = $region13
    $region12: #{tpu_custom_call.1} parent=1 // pred_region
      _
    $region13: #{tpu_custom_call.1} parent=1 // pred_fallthru
      _
    // Predicated region
    $region14: #{tpu_custom_call.1} parent=1 // pred_check
      _
    $region15: #{tpu_custom_call.1} parent=1 // pred_check_branch
      %27 = sbr.rel (0) target = $region17
    $region16: #{tpu_custom_call.1} parent=1 // pred_region
      %s29 = ssub.s32 4096, 4096
      %30 = vsyncadd [#allocation3], %s29
      %s31 = sshll.u32 [#allocation2], 4
      %s32 = int_to_ptr.vmem [resolvable:$true] %s31
      %37 = dma.hbm_to_vmem [thread:$0]  %s3, 4096, %s32, [#allocation3], 128, 128, 8
    $region17: #{tpu_custom_call.1} parent=1 // pred_fallthru
      _
    // Predicated region
    $region18: #{tpu_custom_call.1} parent=1 // pred_check
      _
    $region19: #{tpu_custom_call.1} parent=1 // pred_check_branch
      %39 = sbr.rel (0) target = $region21
    $region20: #{tpu_custom_call.1} parent=1 // pred_region
      _
    $region21: #{tpu_custom_call.1} parent=1 // pred_fallthru
      _
    // Predicated region
    $region22: #{tpu_custom_call.1} parent=1 // pred_check
      _
    $region23: #{tpu_custom_call.1} parent=1 // pred_check_branch
      %41 = sbr.rel (0) target = $region25
    $region24: #{tpu_custom_call.1} parent=1 // pred_region
      %s43 = ssub.s32 4096, 4096
      %44 = vsyncadd [#allocation6], %s43
      %s45 = sshll.u32 [#allocation5], 4
      %s46 = int_to_ptr.vmem [resolvable:$true] %s45
      %51 = dma.hbm_to_vmem [thread:$0]  %s5, 4096, %s46, [#allocation6], 128, 128, 8
    $region25: #{tpu_custom_call.1} parent=1 // pred_fallthru
      _
    // Predicated region
    $region26: #{tpu_custom_call.1} parent=1 // pred_check
      _
    $region27: #{tpu_custom_call.1} parent=1 // pred_check_branch
      %53 = sbr.rel (0) target = $region29
    $region28: #{tpu_custom_call.1} parent=1 // pred_region
      _
    $region29: #{tpu_custom_call.1} parent=1 // pred_fallthru
      _
    // Predicated region
    $region30: #{tpu_custom_call.1} parent=1 // pred_check
      _
    $region31: #{tpu_custom_call.1} parent=1 // pred_check_branch
      %55 = sbr.rel (0) target = $region33
    $region32: #{tpu_custom_call.1} parent=1 // pred_region
      %s57 = ssub.s32 4096, 4096
      %58 = vsyncadd [#allocation6], %s57
      %s59 = sshll.u32 [#allocation7], 4
      %s60 = int_to_ptr.vmem [resolvable:$true] %s59
      %65 = dma.hbm_to_vmem [thread:$0]  %s7, 4096, %s60, [#allocation6], 128, 128, 8
    $region33: #{tpu_custom_call.1} parent=1 // pred_fallthru
      _
    // Predicated region
    $region34: #{tpu_custom_call.1} parent=1 // pred_check
      _
    $region35: #{tpu_custom_call.1} parent=1 // pred_check_branch
      %67 = sbr.rel (0) target = $region37
    $region36: #{tpu_custom_call.1} parent=1 // pred_region
      _
    $region37: #{tpu_custom_call.1} parent=1 // pred_fallthru
      _
    // Predicated region
    $region38: #{tpu_custom_call.1} parent=1 // pred_check
      _
    $region39: #{tpu_custom_call.1} parent=1 // pred_check_branch
      %69 = sbr.rel (0) target = $region41
    $region40: #{tpu_custom_call.1} parent=1 // pred_region
      %70 = dma.done [#allocation3], 4096
    $region41: #{tpu_custom_call.1} parent=1 // pred_fallthru
      _
    // Predicated region
    $region42: #{tpu_custom_call.1} parent=1 // pred_check
      _
    $region43: #{tpu_custom_call.1} parent=1 // pred_check_branch
      %72 = sbr.rel (0) target = $region45
    $region44: #{tpu_custom_call.1} parent=1 // pred_region
      %73 = dma.done [#allocation6], 4096
    $region45: #{tpu_custom_call.1} parent=1 // pred_fallthru
      _
    // Predicated region
    $region46: #{tpu_custom_call.1} parent=1 // pred_check
      _
    $region47: #{tpu_custom_call.1} parent=1 // pred_check_branch
      %75 = sbr.rel (0) target = $region49
    $region48: #{tpu_custom_call.1} parent=1 // pred_region
      %76 = dma.done [#allocation6], 4096
    $region49: #{tpu_custom_call.1} parent=1 // pred_fallthru
      _
    %v78 = vld [vmem:[%s2] sm:$0x3]
    %v79 = vld [vmem:[%s4] sm:$0x3]
    %v80 = vld [vmem:[%s6] sm:$0x3]
    %v81 = vld [vmem:[%s8] sm:$0x3]
    %v82 = vld [vmem:[%s0] sm:$0xff]
    %v83 = vld [vmem:[%s0 + $0x8] sm:$0xff]
    %v84 = vld [vmem:[%s0 + $0x10] sm:$0xff]
    %v85 = vld [vmem:[%s0 + $0x18] sm:$0xff]
    %v86 = vld [vmem:[%s0 + $0x20] sm:$0xff]
    %v87 = vld [vmem:[%s0 + $0x28] sm:$0xff]
    %v88 = vld [vmem:[%s0 + $0x30] sm:$0xff]
    %v89 = vld [vmem:[%s0 + $0x38] sm:$0xff]
    %v90 = vld [vmem:[%s0 + $0x40] sm:$0xff]
    %v91 = vld [vmem:[%s0 + $0x48] sm:$0xff]
    %v92 = vld [vmem:[%s0 + $0x50] sm:$0xff]
    %v93 = vld [vmem:[%s0 + $0x58] sm:$0xff]
    %v94 = vld [vmem:[%s0 + $0x60] sm:$0xff]
    %v95 = vld [vmem:[%s0 + $0x68] sm:$0xff]
    %v96 = vld [vmem:[%s0 + $0x70] sm:$0xff]
    %v97 = vld [vmem:[%s0 + $0x78] sm:$0xff]
    %v98 = vpack.c.bf16 %v83, %v82
    %v99 = vpack.c.bf16 %v85, %v84
    %v100 = vpack.c.bf16 %v87, %v86
    %v101 = vpack.c.bf16 %v89, %v88
    %v102 = vpack.c.bf16 %v91, %v90
    %v103 = vpack.c.bf16 %v93, %v92
    %v104 = vpack.c.bf16 %v95, %v94
    %v105 = vpack.c.bf16 %v97, %v96
    %v106 = vld [vmem:[%s1] sm:$0xff]
    %v108 = vlaneseq
    %v109 = vshrl.u32 %v108, 7
    %v110 = vsub.s32 0, %v109
    %v111 = vrot.slane %v78, %v110
    %v112 = vlaneseq
    %v113 = vshrl.u32 %v112, 7
    %v114 = vsub.s32 1, %v113
    %v115 = vrot.slane %v78, %v114
    %v119 = vunpack.c.l.b16 %v106
    %v120 = vunpack.c.h.b16 %v106
    %v121 = vpack.c.b16 %v119, %v119
    %v122 = vpack.c.b16 %v120, %v120
    %vm123 = vcmask 64512
    %v125 = vsel %vm123, %v98, 0
    %v128 = vsel %vm123, %v99, 0
    %v131 = vsel %vm123, %v100, 0
    %v134 = vsel %vm123, %v101, 0
    %v137 = vsel %vm123, %v102, 0
    %v140 = vsel %vm123, %v103, 0
    %v143 = vsel %vm123, %v104, 0
    %v146 = vsel %vm123, %v105, 0
    %vm148 = vcmask 1043456
    %v150 = vsel %vm148, %v121, 0
    %v153 = vsel %vm148, %v122, 0
    %155 = vmatprep.subr.bf16.mxu0 0
    %156 = vmatpush1.bf16.msra.mxu0 0
    %157 = vmatprep.subr.bf16.mxu0 0
    %158 = vmatpush1.bf16.msra.mxu0 0
    %159 = vmatprep.subr.bf16.mxu0 0
    %160 = vmatpush1.bf16.msra.mxu0 0
    %161 = vmatprep.subr.bf16.mxu0 0
    %162 = vmatpush1.bf16.msra.mxu0 0
    %163 = vmatprep.subr.bf16.mxu0 0
    %164 = vmatpush1.bf16.msra.mxu0 0
    %165 = vmatprep.subr.bf16.mxu0 0
    %166 = vmatpush1.bf16.msra.mxu0 0
    %167 = vmatprep.subr.bf16.mxu0 0
    %168 = vmatpush1.bf16.msra.mxu0 0
    %169 = vmatprep.subr.bf16.mxu0 %v153
    %170 = vmatpush1.bf16.msra.mxu0 %v150
    %171 = vmatprep.subr.bf16.mxu0 0
    %172 = vmatpush2.bf16.msra.mxu0 0
    %173 = vmatprep.subr.bf16.mxu0 0
    %174 = vmatpush2.bf16.msra.mxu0 0
    %175 = vmatprep.subr.bf16.mxu0 0
    %176 = vmatpush2.bf16.msra.mxu0 0
    %177 = vmatprep.subr.bf16.mxu0 0
    %178 = vmatpush2.bf16.msra.mxu0 0
    %179 = vmatprep.subr.bf16.mxu0 0
    %180 = vmatpush2.bf16.msra.mxu0 0
    %181 = vmatprep.subr.bf16.mxu0 0
    %182 = vmatpush2.bf16.msra.mxu0 0
    %183 = vmatprep.subr.bf16.mxu0 0
    %184 = vmatpush2.bf16.msra.mxu0 0
    %185 = vmatprep.subr.bf16.mxu0 0
    %186 = vmatpush2.bf16.msra.mxu0 0
    %187 = vmatprep.mubr.bf16.mxu0 0
    %188 = vmatmul.mubr.bf16.gmra.mxu0 %v125
    %v189 = vpop.f32.mrf.mxu0
    %v190 = vadd.f32 %v111, %v189
    %v191 = vpop.f32.mrf.mxu0
    %v192 = vadd.f32 %v115, %v191
    %v193 = vpop.f32.mrf.mxu0
    %v194 = vadd.f32 %v111, %v193
    %v195 = vpop.f32.mrf.mxu0
    %v196 = vadd.f32 %v115, %v195
    %197 = vmatprep.mubr.bf16.mxu0 0
    %198 = vmatmul.mubr.bf16.gmra.mxu0 %v128
    %v199 = vpop.f32.mrf.mxu0
    %v200 = vadd.f32 %v111, %v199
    %v201 = vpop.f32.mrf.mxu0
    %v202 = vadd.f32 %v115, %v201
    %v203 = vpop.f32.mrf.mxu0
    %v204 = vadd.f32 %v111, %v203
    %v205 = vpop.f32.mrf.mxu0
    %v206 = vadd.f32 %v115, %v205
    %207 = vmatprep.mubr.bf16.mxu0 0
    %208 = vmatmul.mubr.bf16.gmra.mxu0 %v131
    %v209 = vpop.f32.mrf.mxu0
    %v210 = vadd.f32 %v111, %v209
    %v211 = vpop.f32.mrf.mxu0
    %v212 = vadd.f32 %v115, %v211
    %v213 = vpop.f32.mrf.mxu0
    %v214 = vadd.f32 %v111, %v213
    %v215 = vpop.f32.mrf.mxu0
    %v216 = vadd.f32 %v115, %v215
    %217 = vmatprep.mubr.bf16.mxu0 0
    %218 = vmatmul.mubr.bf16.gmra.mxu0 %v134
    %v219 = vpop.f32.mrf.mxu0
    %v220 = vadd.f32 %v111, %v219
    %v221 = vpop.f32.mrf.mxu0
    %v222 = vadd.f32 %v115, %v221
    %v223 = vpop.f32.mrf.mxu0
    %v224 = vadd.f32 %v111, %v223
    %v225 = vpop.f32.mrf.mxu0
    %v226 = vadd.f32 %v115, %v225
    %227 = vmatprep.mubr.bf16.mxu0 0
    %228 = vmatmul.mubr.bf16.gmra.mxu0 %v137
    %v229 = vpop.f32.mrf.mxu0
    %v230 = vadd.f32 %v111, %v229
    %v231 = vpop.f32.mrf.mxu0
    %v232 = vadd.f32 %v115, %v231
    %v233 = vpop.f32.mrf.mxu0
    %v234 = vadd.f32 %v111, %v233
    %v235 = vpop.f32.mrf.mxu0
    %v236 = vadd.f32 %v115, %v235
    %237 = vmatprep.mubr.bf16.mxu0 0
    %238 = vmatmul.mubr.bf16.gmra.mxu0 %v140
    %v239 = vpop.f32.mrf.mxu0
    %v240 = vadd.f32 %v111, %v239
    %v241 = vpop.f32.mrf.mxu0
    %v242 = vadd.f32 %v115, %v241
    %v243 = vpop.f32.mrf.mxu0
    %v244 = vadd.f32 %v111, %v243
    %v245 = vpop.f32.mrf.mxu0
    %v246 = vadd.f32 %v115, %v245
    %247 = vmatprep.mubr.bf16.mxu0 0
    %248 = vmatmul.mubr.bf16.gmra.mxu0 %v143
    %v249 = vpop.f32.mrf.mxu0
    %v250 = vadd.f32 %v111, %v249
    %v251 = vpop.f32.mrf.mxu0
    %v252 = vadd.f32 %v115, %v251
    %v253 = vpop.f32.mrf.mxu0
    %v254 = vadd.f32 %v111, %v253
    %v255 = vpop.f32.mrf.mxu0
    %v256 = vadd.f32 %v115, %v255
    %257 = vmatprep.mubr.bf16.mxu0 0
    %258 = vmatmul.mubr.bf16.gmra.mxu0 %v146
    %v259 = vpop.f32.mrf.mxu0
    %v260 = vadd.f32 %v111, %v259
    %v261 = vpop.f32.mrf.mxu0
    %v262 = vadd.f32 %v115, %v261
    %v263 = vpop.f32.mrf.mxu0
    %v264 = vadd.f32 %v111, %v263
    %v265 = vpop.f32.mrf.mxu0
    %v266 = vadd.f32 %v115, %v265
    %267 = vdwg.mxu0
    %v268 = vmax.f32 %v190, 0.0
    %v269 = vmax.f32 %v192, 0.0
    %v270 = vmax.f32 %v194, 0.0
    %v271 = vmax.f32 %v196, 0.0
    %v272 = vmax.f32 %v200, 0.0
    %v273 = vmax.f32 %v202, 0.0
    %v274 = vmax.f32 %v204, 0.0
    %v275 = vmax.f32 %v206, 0.0
    %v276 = vmax.f32 %v210, 0.0
    %v277 = vmax.f32 %v212, 0.0
    %v278 = vmax.f32 %v214, 0.0
    %v279 = vmax.f32 %v216, 0.0
    %v280 = vmax.f32 %v220, 0.0
    %v281 = vmax.f32 %v222, 0.0
    %v282 = vmax.f32 %v224, 0.0
    %v283 = vmax.f32 %v226, 0.0
    %v284 = vmax.f32 %v230, 0.0
    %v285 = vmax.f32 %v232, 0.0
    %v286 = vmax.f32 %v234, 0.0
    %v287 = vmax.f32 %v236, 0.0
    %v288 = vmax.f32 %v240, 0.0
    %v289 = vmax.f32 %v242, 0.0
    %v290 = vmax.f32 %v244, 0.0
    %v291 = vmax.f32 %v246, 0.0
    %v292 = vmax.f32 %v250, 0.0
    %v293 = vmax.f32 %v252, 0.0
    %v294 = vmax.f32 %v254, 0.0
    %v295 = vmax.f32 %v256, 0.0
    %v296 = vmax.f32 %v260, 0.0
    %v297 = vmax.f32 %v262, 0.0
    %v298 = vmax.f32 %v264, 0.0
    %v299 = vmax.f32 %v266, 0.0
    %v300 = vpack.c.bf16 %v270, %v268
    %v301 = vpack.c.bf16 %v271, %v269
    %v302 = vpack.c.bf16 %v274, %v272
    %v303 = vpack.c.bf16 %v275, %v273
    %v304 = vpack.c.bf16 %v278, %v276
    %v305 = vpack.c.bf16 %v279, %v277
    %v306 = vpack.c.bf16 %v282, %v280
    %v307 = vpack.c.bf16 %v283, %v281
    %v308 = vpack.c.bf16 %v286, %v284
    %v309 = vpack.c.bf16 %v287, %v285
    %v310 = vpack.c.bf16 %v290, %v288
    %v311 = vpack.c.bf16 %v291, %v289
    %v312 = vpack.c.bf16 %v294, %v292
    %v313 = vpack.c.bf16 %v295, %v293
    %v314 = vpack.c.bf16 %v298, %v296
    %v315 = vpack.c.bf16 %v299, %v297
    %v316 = vld [vmem:[#allocation2] sm:$0xff]
    %v317 = vld [vmem:[#allocation2 + $0x8] sm:$0xff]
    %v318 = vld [vmem:[#allocation2 + $0x10] sm:$0xff]
    %v319 = vld [vmem:[#allocation2 + $0x18] sm:$0xff]
    %v320 = vld [vmem:[#allocation2 + $0x20] sm:$0xff]
    %v321 = vld [vmem:[#allocation2 + $0x28] sm:$0xff]
    %v322 = vld [vmem:[#allocation2 + $0x30] sm:$0xff]
    %v323 = vld [vmem:[#allocation2 + $0x38] sm:$0xff]
    %v324 = vld [vmem:[#allocation2 + $0x40] sm:$0xff]
    %v325 = vld [vmem:[#allocation2 + $0x48] sm:$0xff]
    %v326 = vld [vmem:[#allocation2 + $0x50] sm:$0xff]
    %v327 = vld [vmem:[#allocation2 + $0x58] sm:$0xff]
    %v328 = vld [vmem:[#allocation2 + $0x60] sm:$0xff]
    %v329 = vld [vmem:[#allocation2 + $0x68] sm:$0xff]
    %v330 = vld [vmem:[#allocation2 + $0x70] sm:$0xff]
    %v331 = vld [vmem:[#allocation2 + $0x78] sm:$0xff]
    %v332 = vld [vmem:[#allocation2 + $0x80] sm:$0xff]
    %v333 = vld [vmem:[#allocation2 + $0x88] sm:$0xff]
    %v334 = vld [vmem:[#allocation2 + $0x90] sm:$0xff]
    %v335 = vld [vmem:[#allocation2 + $0x98] sm:$0xff]
    %v336 = vld [vmem:[#allocation2 + $0xa0] sm:$0xff]
    %v337 = vld [vmem:[#allocation2 + $0xa8] sm:$0xff]
    %v338 = vld [vmem:[#allocation2 + $0xb0] sm:$0xff]
    %v339 = vld [vmem:[#allocation2 + $0xb8] sm:$0xff]
    %v340 = vld [vmem:[#allocation2 + $0xc0] sm:$0xff]
    %v341 = vld [vmem:[#allocation2 + $0xc8] sm:$0xff]
    %v342 = vld [vmem:[#allocation2 + $0xd0] sm:$0xff]
    %v343 = vld [vmem:[#allocation2 + $0xd8] sm:$0xff]
    %v344 = vld [vmem:[#allocation2 + $0xe0] sm:$0xff]
    %v345 = vld [vmem:[#allocation2 + $0xe8] sm:$0xff]
    %v346 = vld [vmem:[#allocation2 + $0xf0] sm:$0xff]
    %v347 = vld [vmem:[#allocation2 + $0xf8] sm:$0xff]
    %v349 = vlaneseq
    %v350 = vshrl.u32 %v349, 7
    %v351 = vsub.s32 0, %v350
    %v352 = vrot.slane %v79, %v351
    %v353 = vlaneseq
    %v354 = vshrl.u32 %v353, 7
    %v355 = vsub.s32 1, %v354
    %v356 = vrot.slane %v79, %v355
    %v391 = vunpack.c.l.b16 %v316
    %v392 = vunpack.c.h.b16 %v316
    %v393 = vunpack.c.l.b16 %v317
    %v394 = vunpack.c.h.b16 %v317
    %v395 = vunpack.c.l.b16 %v318
    %v396 = vunpack.c.h.b16 %v318
    %v397 = vunpack.c.l.b16 %v319
    %v398 = vunpack.c.h.b16 %v319
    %v399 = vunpack.c.l.b16 %v320
    %v400 = vunpack.c.h.b16 %v320
    %v401 = vunpack.c.l.b16 %v321
    %v402 = vunpack.c.h.b16 %v321
    %v403 = vunpack.c.l.b16 %v322
    %v404 = vunpack.c.h.b16 %v322
    %v405 = vunpack.c.l.b16 %v323
    %v406 = vunpack.c.h.b16 %v323
    %v407 = vunpack.c.l.b16 %v324
    %v408 = vunpack.c.h.b16 %v324
    %v409 = vunpack.c.l.b16 %v325
    %v410 = vunpack.c.h.b16 %v325
    %v411 = vunpack.c.l.b16 %v326
    %v412 = vunpack.c.h.b16 %v326
    %v413 = vunpack.c.l.b16 %v327
    %v414 = vunpack.c.h.b16 %v327
    %v415 = vunpack.c.l.b16 %v328
    %v416 = vunpack.c.h.b16 %v328
    %v417 = vunpack.c.l.b16 %v329
    %v418 = vunpack.c.h.b16 %v329
    %v419 = vunpack.c.l.b16 %v330
    %v420 = vunpack.c.h.b16 %v330
    %v421 = vunpack.c.l.b16 %v331
    %v422 = vunpack.c.h.b16 %v331
    %v423 = vunpack.c.l.b16 %v332
    %v424 = vunpack.c.h.b16 %v332
    %v425 = vunpack.c.l.b16 %v333
    %v426 = vunpack.c.h.b16 %v333
    %v427 = vunpack.c.l.b16 %v334
    %v428 = vunpack.c.h.b16 %v334
    %v429 = vunpack.c.l.b16 %v335
    %v430 = vunpack.c.h.b16 %v335
    %v431 = vunpack.c.l.b16 %v336
    %v432 = vunpack.c.h.b16 %v336
    %v433 = vunpack.c.l.b16 %v337
    %v434 = vunpack.c.h.b16 %v337
    %v435 = vunpack.c.l.b16 %v338
    %v436 = vunpack.c.h.b16 %v338
    %v437 = vunpack.c.l.b16 %v339
    %v438 = vunpack.c.h.b16 %v339
    %v439 = vunpack.c.l.b16 %v340
    %v440 = vunpack.c.h.b16 %v340
    %v441 = vunpack.c.l.b16 %v341
    %v442 = vunpack.c.h.b16 %v341
    %v443 = vunpack.c.l.b16 %v342
    %v444 = vunpack.c.h.b16 %v342
    %v445 = vunpack.c.l.b16 %v343
    %v446 = vunpack.c.h.b16 %v343
    %v447 = vunpack.c.l.b16 %v344
    %v448 = vunpack.c.h.b16 %v344
    %v449 = vunpack.c.l.b16 %v345
    %v450 = vunpack.c.h.b16 %v345
    %v451 = vunpack.c.l.b16 %v346
    %v452 = vunpack.c.h.b16 %v346
    %v453 = vunpack.c.l.b16 %v347
    %v454 = vunpack.c.h.b16 %v347
    %v455 = vpack.c.b16 %v393, %v391
    %v456 = vpack.c.b16 %v394, %v392
    %v457 = vpack.c.b16 %v397, %v395
    %v458 = vpack.c.b16 %v398, %v396
    %v459 = vpack.c.b16 %v401, %v399
    %v460 = vpack.c.b16 %v402, %v400
    %v461 = vpack.c.b16 %v405, %v403
    %v462 = vpack.c.b16 %v406, %v404
    %v463 = vpack.c.b16 %v409, %v407
    %v464 = vpack.c.b16 %v410, %v408
    %v465 = vpack.c.b16 %v413, %v411
    %v466 = vpack.c.b16 %v414, %v412
    %v467 = vpack.c.b16 %v417, %v415
    %v468 = vpack.c.b16 %v418, %v416
    %v469 = vpack.c.b16 %v421, %v419
    %v470 = vpack.c.b16 %v422, %v420
    %v471 = vpack.c.b16 %v425, %v423
    %v472 = vpack.c.b16 %v426, %v424
    %v473 = vpack.c.b16 %v429, %v427
    %v474 = vpack.c.b16 %v430, %v428
    %v475 = vpack.c.b16 %v433, %v431
    %v476 = vpack.c.b16 %v434, %v432
    %v477 = vpack.c.b16 %v437, %v435
    %v478 = vpack.c.b16 %v438, %v436
    %v479 = vpack.c.b16 %v441, %v439
    %v480 = vpack.c.b16 %v442, %v440
    %v481 = vpack.c.b16 %v445, %v443
    %v482 = vpack.c.b16 %v446, %v444
    %v483 = vpack.c.b16 %v449, %v447
    %v484 = vpack.c.b16 %v450, %v448
    %v485 = vpack.c.b16 %v453, %v451
    %v486 = vpack.c.b16 %v454, %v452
    %519 = vmatprep.subr.bf16.mxu0 %v470
    %520 = vmatpush1.bf16.msra.mxu0 %v469
    %521 = vmatprep.subr.bf16.mxu0 %v468
    %522 = vmatpush1.bf16.msra.mxu0 %v467
    %523 = vmatprep.subr.bf16.mxu0 %v466
    %524 = vmatpush1.bf16.msra.mxu0 %v465
    %525 = vmatprep.subr.bf16.mxu0 %v464
    %526 = vmatpush1.bf16.msra.mxu0 %v463
    %527 = vmatprep.subr.bf16.mxu0 %v462
    %528 = vmatpush1.bf16.msra.mxu0 %v461
    %529 = vmatprep.subr.bf16.mxu0 %v460
    %530 = vmatpush1.bf16.msra.mxu0 %v459
    %531 = vmatprep.subr.bf16.mxu0 %v458
    %532 = vmatpush1.bf16.msra.mxu0 %v457
    %533 = vmatprep.subr.bf16.mxu0 %v456
    %534 = vmatpush1.bf16.msra.mxu0 %v455
    %535 = vmatprep.subr.bf16.mxu0 %v486
    %536 = vmatpush2.bf16.msra.mxu0 %v485
    %537 = vmatprep.subr.bf16.mxu0 %v484
    %538 = vmatpush2.bf16.msra.mxu0 %v483
    %539 = vmatprep.subr.bf16.mxu0 %v482
    %540 = vmatpush2.bf16.msra.mxu0 %v481
    %541 = vmatprep.subr.bf16.mxu0 %v480
    %542 = vmatpush2.bf16.msra.mxu0 %v479
    %543 = vmatprep.subr.bf16.mxu0 %v478
    %544 = vmatpush2.bf16.msra.mxu0 %v477
    %545 = vmatprep.subr.bf16.mxu0 %v476
    %546 = vmatpush2.bf16.msra.mxu0 %v475
    %547 = vmatprep.subr.bf16.mxu0 %v474
    %548 = vmatpush2.bf16.msra.mxu0 %v473
    %549 = vmatprep.subr.bf16.mxu0 %v472
    %550 = vmatpush2.bf16.msra.mxu0 %v471
    %551 = vmatprep.mubr.bf16.mxu0 %v301
    %552 = vmatmul.mubr.bf16.gmra.mxu0 %v300
    %v553 = vpop.f32.mrf.mxu0
    %v554 = vadd.f32 %v352, %v553
    %v555 = vpop.f32.mrf.mxu0
    %v556 = vadd.f32 %v356, %v555
    %v557 = vpop.f32.mrf.mxu0
    %v558 = vadd.f32 %v352, %v557
    %v559 = vpop.f32.mrf.mxu0
    %v560 = vadd.f32 %v356, %v559
    %561 = vmatprep.mubr.bf16.mxu0 %v303
    %562 = vmatmul.mubr.bf16.gmra.mxu0 %v302
    %v563 = vpop.f32.mrf.mxu0
    %v564 = vadd.f32 %v352, %v563
    %v565 = vpop.f32.mrf.mxu0
    %v566 = vadd.f32 %v356, %v565
    %v567 = vpop.f32.mrf.mxu0
    %v568 = vadd.f32 %v352, %v567
    %v569 = vpop.f32.mrf.mxu0
    %v570 = vadd.f32 %v356, %v569
    %571 = vmatprep.mubr.bf16.mxu0 %v305
    %572 = vmatmul.mubr.bf16.gmra.mxu0 %v304
    %v573 = vpop.f32.mrf.mxu0
    %v574 = vadd.f32 %v352, %v573
    %v575 = vpop.f32.mrf.mxu0
    %v576 = vadd.f32 %v356, %v575
    %v577 = vpop.f32.mrf.mxu0
    %v578 = vadd.f32 %v352, %v577
    %v579 = vpop.f32.mrf.mxu0
    %v580 = vadd.f32 %v356, %v579
    %581 = vmatprep.mubr.bf16.mxu0 %v307
    %582 = vmatmul.mubr.bf16.gmra.mxu0 %v306
    %v583 = vpop.f32.mrf.mxu0
    %v584 = vadd.f32 %v352, %v583
    %v585 = vpop.f32.mrf.mxu0
    %v586 = vadd.f32 %v356, %v585
    %v587 = vpop.f32.mrf.mxu0
    %v588 = vadd.f32 %v352, %v587
    %v589 = vpop.f32.mrf.mxu0
    %v590 = vadd.f32 %v356, %v589
    %591 = vmatprep.mubr.bf16.mxu0 %v309
    %592 = vmatmul.mubr.bf16.gmra.mxu0 %v308
    %v593 = vpop.f32.mrf.mxu0
    %v594 = vadd.f32 %v352, %v593
    %v595 = vpop.f32.mrf.mxu0
    %v596 = vadd.f32 %v356, %v595
    %v597 = vpop.f32.mrf.mxu0
    %v598 = vadd.f32 %v352, %v597
    %v599 = vpop.f32.mrf.mxu0
    %v600 = vadd.f32 %v356, %v599
    %601 = vmatprep.mubr.bf16.mxu0 %v311
    %602 = vmatmul.mubr.bf16.gmra.mxu0 %v310
    %v603 = vpop.f32.mrf.mxu0
    %v604 = vadd.f32 %v352, %v603
    %v605 = vpop.f32.mrf.mxu0
    %v606 = vadd.f32 %v356, %v605
    %v607 = vpop.f32.mrf.mxu0
    %v608 = vadd.f32 %v352, %v607
    %v609 = vpop.f32.mrf.mxu0
    %v610 = vadd.f32 %v356, %v609
    %611 = vmatprep.mubr.bf16.mxu0 %v313
    %612 = vmatmul.mubr.bf16.gmra.mxu0 %v312
    %v613 = vpop.f32.mrf.mxu0
    %v614 = vadd.f32 %v352, %v613
    %v615 = vpop.f32.mrf.mxu0
    %v616 = vadd.f32 %v356, %v615
    %v617 = vpop.f32.mrf.mxu0
    %v618 = vadd.f32 %v352, %v617
    %v619 = vpop.f32.mrf.mxu0
    %v620 = vadd.f32 %v356, %v619
    %621 = vmatprep.mubr.bf16.mxu0 %v315
    %622 = vmatmul.mubr.bf16.gmra.mxu0 %v314
    %v623 = vpop.f32.mrf.mxu0
    %v624 = vadd.f32 %v352, %v623
    %v625 = vpop.f32.mrf.mxu0
    %v626 = vadd.f32 %v356, %v625
    %v627 = vpop.f32.mrf.mxu0
    %v628 = vadd.f32 %v352, %v627
    %v629 = vpop.f32.mrf.mxu0
    %v630 = vadd.f32 %v356, %v629
    %631 = vdwg.mxu0
    %v632 = vmax.f32 %v554, 0.0
    %v633 = vmax.f32 %v556, 0.0
    %v634 = vmax.f32 %v558, 0.0
    %v635 = vmax.f32 %v560, 0.0
    %v636 = vmax.f32 %v564, 0.0
    %v637 = vmax.f32 %v566, 0.0
    %v638 = vmax.f32 %v568, 0.0
    %v639 = vmax.f32 %v570, 0.0
    %v640 = vmax.f32 %v574, 0.0
    %v641 = vmax.f32 %v576, 0.0
    %v642 = vmax.f32 %v578, 0.0
    %v643 = vmax.f32 %v580, 0.0
    %v644 = vmax.f32 %v584, 0.0
    %v645 = vmax.f32 %v586, 0.0
    %v646 = vmax.f32 %v588, 0.0
    %v647 = vmax.f32 %v590, 0.0
    %v648 = vmax.f32 %v594, 0.0
    %v649 = vmax.f32 %v596, 0.0
    %v650 = vmax.f32 %v598, 0.0
    %v651 = vmax.f32 %v600, 0.0
    %v652 = vmax.f32 %v604, 0.0
    %v653 = vmax.f32 %v606, 0.0
    %v654 = vmax.f32 %v608, 0.0
    %v655 = vmax.f32 %v610, 0.0
    %v656 = vmax.f32 %v614, 0.0
    %v657 = vmax.f32 %v616, 0.0
    %v658 = vmax.f32 %v618, 0.0
    %v659 = vmax.f32 %v620, 0.0
    %v660 = vmax.f32 %v624, 0.0
    %v661 = vmax.f32 %v626, 0.0
    %v662 = vmax.f32 %v628, 0.0
    %v663 = vmax.f32 %v630, 0.0
    %v664 = vpack.c.bf16 %v634, %v632
    %v665 = vpack.c.bf16 %v635, %v633
    %v666 = vpack.c.bf16 %v638, %v636
    %v667 = vpack.c.bf16 %v639, %v637
    %v668 = vpack.c.bf16 %v642, %v640
    %v669 = vpack.c.bf16 %v643, %v641
    %v670 = vpack.c.bf16 %v646, %v644
    %v671 = vpack.c.bf16 %v647, %v645
    %v672 = vpack.c.bf16 %v650, %v648
    %v673 = vpack.c.bf16 %v651, %v649
    %v674 = vpack.c.bf16 %v654, %v652
    %v675 = vpack.c.bf16 %v655, %v653
    %v676 = vpack.c.bf16 %v658, %v656
    %v677 = vpack.c.bf16 %v659, %v657
    %v678 = vpack.c.bf16 %v662, %v660
    %v679 = vpack.c.bf16 %v663, %v661
    %v680 = vld [vmem:[#allocation5] sm:$0xff]
    %v681 = vld [vmem:[#allocation5 + $0x8] sm:$0xff]
    %v682 = vld [vmem:[#allocation5 + $0x10] sm:$0xff]
    %v683 = vld [vmem:[#allocation5 + $0x18] sm:$0xff]
    %v684 = vld [vmem:[#allocation5 + $0x20] sm:$0xff]
    %v685 = vld [vmem:[#allocation5 + $0x28] sm:$0xff]
    %v686 = vld [vmem:[#allocation5 + $0x30] sm:$0xff]
    %v687 = vld [vmem:[#allocation5 + $0x38] sm:$0xff]
    %v688 = vld [vmem:[#allocation5 + $0x40] sm:$0xff]
    %v689 = vld [vmem:[#allocation5 + $0x48] sm:$0xff]
    %v690 = vld [vmem:[#allocation5 + $0x50] sm:$0xff]
    %v691 = vld [vmem:[#allocation5 + $0x58] sm:$0xff]
    %v692 = vld [vmem:[#allocation5 + $0x60] sm:$0xff]
    %v693 = vld [vmem:[#allocation5 + $0x68] sm:$0xff]
    %v694 = vld [vmem:[#allocation5 + $0x70] sm:$0xff]
    %v695 = vld [vmem:[#allocation5 + $0x78] sm:$0xff]
    %v696 = vld [vmem:[#allocation5 + $0x80] sm:$0xff]
    %v697 = vld [vmem:[#allocation5 + $0x88] sm:$0xff]
    %v698 = vld [vmem:[#allocation5 + $0x90] sm:$0xff]
    %v699 = vld [vmem:[#allocation5 + $0x98] sm:$0xff]
    %v700 = vld [vmem:[#allocation5 + $0xa0] sm:$0xff]
    %v701 = vld [vmem:[#allocation5 + $0xa8] sm:$0xff]
    %v702 = vld [vmem:[#allocation5 + $0xb0] sm:$0xff]
    %v703 = vld [vmem:[#allocation5 + $0xb8] sm:$0xff]
    %v704 = vld [vmem:[#allocation5 + $0xc0] sm:$0xff]
    %v705 = vld [vmem:[#allocation5 + $0xc8] sm:$0xff]
    %v706 = vld [vmem:[#allocation5 + $0xd0] sm:$0xff]
    %v707 = vld [vmem:[#allocation5 + $0xd8] sm:$0xff]
    %v708 = vld [vmem:[#allocation5 + $0xe0] sm:$0xff]
    %v709 = vld [vmem:[#allocation5 + $0xe8] sm:$0xff]
    %v710 = vld [vmem:[#allocation5 + $0xf0] sm:$0xff]
    %v711 = vld [vmem:[#allocation5 + $0xf8] sm:$0xff]
    %v713 = vlaneseq
    %v714 = vshrl.u32 %v713, 7
    %v715 = vsub.s32 0, %v714
    %v716 = vrot.slane %v80, %v715
    %v717 = vlaneseq
    %v718 = vshrl.u32 %v717, 7
    %v719 = vsub.s32 1, %v718
    %v720 = vrot.slane %v80, %v719
    %v755 = vunpack.c.l.b16 %v680
    %v756 = vunpack.c.h.b16 %v680
    %v757 = vunpack.c.l.b16 %v681
    %v758 = vunpack.c.h.b16 %v681
    %v759 = vunpack.c.l.b16 %v682
    %v760 = vunpack.c.h.b16 %v682
    %v761 = vunpack.c.l.b16 %v683
    %v762 = vunpack.c.h.b16 %v683
    %v763 = vunpack.c.l.b16 %v684
    %v764 = vunpack.c.h.b16 %v684
    %v765 = vunpack.c.l.b16 %v685
    %v766 = vunpack.c.h.b16 %v685
    %v767 = vunpack.c.l.b16 %v686
    %v768 = vunpack.c.h.b16 %v686
    %v769 = vunpack.c.l.b16 %v687
    %v770 = vunpack.c.h.b16 %v687
    %v771 = vunpack.c.l.b16 %v688
    %v772 = vunpack.c.h.b16 %v688
    %v773 = vunpack.c.l.b16 %v689
    %v774 = vunpack.c.h.b16 %v689
    %v775 = vunpack.c.l.b16 %v690
    %v776 = vunpack.c.h.b16 %v690
    %v777 = vunpack.c.l.b16 %v691
    %v778 = vunpack.c.h.b16 %v691
    %v779 = vunpack.c.l.b16 %v692
    %v780 = vunpack.c.h.b16 %v692
    %v781 = vunpack.c.l.b16 %v693
    %v782 = vunpack.c.h.b16 %v693
    %v783 = vunpack.c.l.b16 %v694
    %v784 = vunpack.c.h.b16 %v694
    %v785 = vunpack.c.l.b16 %v695
    %v786 = vunpack.c.h.b16 %v695
    %v787 = vunpack.c.l.b16 %v696
    %v788 = vunpack.c.h.b16 %v696
    %v789 = vunpack.c.l.b16 %v697
    %v790 = vunpack.c.h.b16 %v697
    %v791 = vunpack.c.l.b16 %v698
    %v792 = vunpack.c.h.b16 %v698
    %v793 = vunpack.c.l.b16 %v699
    %v794 = vunpack.c.h.b16 %v699
    %v795 = vunpack.c.l.b16 %v700
    %v796 = vunpack.c.h.b16 %v700
    %v797 = vunpack.c.l.b16 %v701
    %v798 = vunpack.c.h.b16 %v701
    %v799 = vunpack.c.l.b16 %v702
    %v800 = vunpack.c.h.b16 %v702
    %v801 = vunpack.c.l.b16 %v703
    %v802 = vunpack.c.h.b16 %v703
    %v803 = vunpack.c.l.b16 %v704
    %v804 = vunpack.c.h.b16 %v704
    %v805 = vunpack.c.l.b16 %v705
    %v806 = vunpack.c.h.b16 %v705
    %v807 = vunpack.c.l.b16 %v706
    %v808 = vunpack.c.h.b16 %v706
    %v809 = vunpack.c.l.b16 %v707
    %v810 = vunpack.c.h.b16 %v707
    %v811 = vunpack.c.l.b16 %v708
    %v812 = vunpack.c.h.b16 %v708
    %v813 = vunpack.c.l.b16 %v709
    %v814 = vunpack.c.h.b16 %v709
    %v815 = vunpack.c.l.b16 %v710
    %v816 = vunpack.c.h.b16 %v710
    %v817 = vunpack.c.l.b16 %v711
    %v818 = vunpack.c.h.b16 %v711
    %v819 = vpack.c.b16 %v757, %v755
    %v820 = vpack.c.b16 %v758, %v756
    %v821 = vpack.c.b16 %v761, %v759
    %v822 = vpack.c.b16 %v762, %v760
    %v823 = vpack.c.b16 %v765, %v763
    %v824 = vpack.c.b16 %v766, %v764
    %v825 = vpack.c.b16 %v769, %v767
    %v826 = vpack.c.b16 %v770, %v768
    %v827 = vpack.c.b16 %v773, %v771
    %v828 = vpack.c.b16 %v774, %v772
    %v829 = vpack.c.b16 %v777, %v775
    %v830 = vpack.c.b16 %v778, %v776
    %v831 = vpack.c.b16 %v781, %v779
    %v832 = vpack.c.b16 %v782, %v780
    %v833 = vpack.c.b16 %v785, %v783
    %v834 = vpack.c.b16 %v786, %v784
    %v835 = vpack.c.b16 %v789, %v787
    %v836 = vpack.c.b16 %v790, %v788
    %v837 = vpack.c.b16 %v793, %v791
    %v838 = vpack.c.b16 %v794, %v792
    %v839 = vpack.c.b16 %v797, %v795
    %v840 = vpack.c.b16 %v798, %v796
    %v841 = vpack.c.b16 %v801, %v799
    %v842 = vpack.c.b16 %v802, %v800
    %v843 = vpack.c.b16 %v805, %v803
    %v844 = vpack.c.b16 %v806, %v804
    %v845 = vpack.c.b16 %v809, %v807
    %v846 = vpack.c.b16 %v810, %v808
    %v847 = vpack.c.b16 %v813, %v811
    %v848 = vpack.c.b16 %v814, %v812
    %v849 = vpack.c.b16 %v817, %v815
    %v850 = vpack.c.b16 %v818, %v816
    %883 = vmatprep.subr.bf16.mxu0 %v834
    %884 = vmatpush1.bf16.msra.mxu0 %v833
    %885 = vmatprep.subr.bf16.mxu0 %v832
    %886 = vmatpush1.bf16.msra.mxu0 %v831
    %887 = vmatprep.subr.bf16.mxu0 %v830
    %888 = vmatpush1.bf16.msra.mxu0 %v829
    %889 = vmatprep.subr.bf16.mxu0 %v828
    %890 = vmatpush1.bf16.msra.mxu0 %v827
    %891 = vmatprep.subr.bf16.mxu0 %v826
    %892 = vmatpush1.bf16.msra.mxu0 %v825
    %893 = vmatprep.subr.bf16.mxu0 %v824
    %894 = vmatpush1.bf16.msra.mxu0 %v823
    %895 = vmatprep.subr.bf16.mxu0 %v822
    %896 = vmatpush1.bf16.msra.mxu0 %v821
    %897 = vmatprep.subr.bf16.mxu0 %v820
    %898 = vmatpush1.bf16.msra.mxu0 %v819
    %899 = vmatprep.subr.bf16.mxu0 %v850
    %900 = vmatpush2.bf16.msra.mxu0 %v849
    %901 = vmatprep.subr.bf16.mxu0 %v848
    %902 = vmatpush2.bf16.msra.mxu0 %v847
    %903 = vmatprep.subr.bf16.mxu0 %v846
    %904 = vmatpush2.bf16.msra.mxu0 %v845
    %905 = vmatprep.subr.bf16.mxu0 %v844
    %906 = vmatpush2.bf16.msra.mxu0 %v843
    %907 = vmatprep.subr.bf16.mxu0 %v842
    %908 = vmatpush2.bf16.msra.mxu0 %v841
    %909 = vmatprep.subr.bf16.mxu0 %v840
    %910 = vmatpush2.bf16.msra.mxu0 %v839
    %911 = vmatprep.subr.bf16.mxu0 %v838
    %912 = vmatpush2.bf16.msra.mxu0 %v837
    %913 = vmatprep.subr.bf16.mxu0 %v836
    %914 = vmatpush2.bf16.msra.mxu0 %v835
    %915 = vmatprep.mubr.bf16.mxu0 %v665
    %916 = vmatmul.mubr.bf16.gmra.mxu0 %v664
    %v917 = vpop.f32.mrf.mxu0
    %v918 = vadd.f32 %v716, %v917
    %v919 = vpop.f32.mrf.mxu0
    %v920 = vadd.f32 %v720, %v919
    %v921 = vpop.f32.mrf.mxu0
    %v922 = vadd.f32 %v716, %v921
    %v923 = vpop.f32.mrf.mxu0
    %v924 = vadd.f32 %v720, %v923
    %925 = vmatprep.mubr.bf16.mxu0 %v667
    %926 = vmatmul.mubr.bf16.gmra.mxu0 %v666
    %v927 = vpop.f32.mrf.mxu0
    %v928 = vadd.f32 %v716, %v927
    %v929 = vpop.f32.mrf.mxu0
    %v930 = vadd.f32 %v720, %v929
    %v931 = vpop.f32.mrf.mxu0
    %v932 = vadd.f32 %v716, %v931
    %v933 = vpop.f32.mrf.mxu0
    %v934 = vadd.f32 %v720, %v933
    %935 = vmatprep.mubr.bf16.mxu0 %v669
    %936 = vmatmul.mubr.bf16.gmra.mxu0 %v668
    %v937 = vpop.f32.mrf.mxu0
    %v938 = vadd.f32 %v716, %v937
    %v939 = vpop.f32.mrf.mxu0
    %v940 = vadd.f32 %v720, %v939
    %v941 = vpop.f32.mrf.mxu0
    %v942 = vadd.f32 %v716, %v941
    %v943 = vpop.f32.mrf.mxu0
    %v944 = vadd.f32 %v720, %v943
    %945 = vmatprep.mubr.bf16.mxu0 %v671
    %946 = vmatmul.mubr.bf16.gmra.mxu0 %v670
    %v947 = vpop.f32.mrf.mxu0
    %v948 = vadd.f32 %v716, %v947
    %v949 = vpop.f32.mrf.mxu0
    %v950 = vadd.f32 %v720, %v949
    %v951 = vpop.f32.mrf.mxu0
    %v952 = vadd.f32 %v716, %v951
    %v953 = vpop.f32.mrf.mxu0
    %v954 = vadd.f32 %v720, %v953
    %955 = vmatprep.mubr.bf16.mxu0 %v673
    %956 = vmatmul.mubr.bf16.gmra.mxu0 %v672
    %v957 = vpop.f32.mrf.mxu0
    %v958 = vadd.f32 %v716, %v957
    %v959 = vpop.f32.mrf.mxu0
    %v960 = vadd.f32 %v720, %v959
    %v961 = vpop.f32.mrf.mxu0
    %v962 = vadd.f32 %v716, %v961
    %v963 = vpop.f32.mrf.mxu0
    %v964 = vadd.f32 %v720, %v963
    %965 = vmatprep.mubr.bf16.mxu0 %v675
    %966 = vmatmul.mubr.bf16.gmra.mxu0 %v674
    %v967 = vpop.f32.mrf.mxu0
    %v968 = vadd.f32 %v716, %v967
    %v969 = vpop.f32.mrf.mxu0
    %v970 = vadd.f32 %v720, %v969
    %v971 = vpop.f32.mrf.mxu0
    %v972 = vadd.f32 %v716, %v971
    %v973 = vpop.f32.mrf.mxu0
    %v974 = vadd.f32 %v720, %v973
    %975 = vmatprep.mubr.bf16.mxu0 %v677
    %976 = vmatmul.mubr.bf16.gmra.mxu0 %v676
    %v977 = vpop.f32.mrf.mxu0
    %v978 = vadd.f32 %v716, %v977
    %v979 = vpop.f32.mrf.mxu0
    %v980 = vadd.f32 %v720, %v979
    %v981 = vpop.f32.mrf.mxu0
    %v982 = vadd.f32 %v716, %v981
    %v983 = vpop.f32.mrf.mxu0
    %v984 = vadd.f32 %v720, %v983
    %985 = vmatprep.mubr.bf16.mxu0 %v679
    %986 = vmatmul.mubr.bf16.gmra.mxu0 %v678
    %v987 = vpop.f32.mrf.mxu0
    %v988 = vadd.f32 %v716, %v987
    %v989 = vpop.f32.mrf.mxu0
    %v990 = vadd.f32 %v720, %v989
    %v991 = vpop.f32.mrf.mxu0
    %v992 = vadd.f32 %v716, %v991
    %v993 = vpop.f32.mrf.mxu0
    %v994 = vadd.f32 %v720, %v993
    %995 = vdwg.mxu0
    %v996 = vpack.c.bf16 %v922, %v918
    %v997 = vpack.c.bf16 %v924, %v920
    %v998 = vpack.c.bf16 %v932, %v928
    %v999 = vpack.c.bf16 %v934, %v930
    %v1000 = vpack.c.bf16 %v942, %v938
    %v1001 = vpack.c.bf16 %v944, %v940
    %v1002 = vpack.c.bf16 %v952, %v948
    %v1003 = vpack.c.bf16 %v954, %v950
    %v1004 = vpack.c.bf16 %v962, %v958
    %v1005 = vpack.c.bf16 %v964, %v960
    %v1006 = vpack.c.bf16 %v972, %v968
    %v1007 = vpack.c.bf16 %v974, %v970
    %v1008 = vpack.c.bf16 %v982, %v978
    %v1009 = vpack.c.bf16 %v984, %v980
    %v1010 = vpack.c.bf16 %v992, %v988
    %v1011 = vpack.c.bf16 %v994, %v990
    %v1012 = vld [vmem:[#allocation7] sm:$0xff]
    %v1013 = vld [vmem:[#allocation7 + $0x8] sm:$0xff]
    %v1014 = vld [vmem:[#allocation7 + $0x10] sm:$0xff]
    %v1015 = vld [vmem:[#allocation7 + $0x18] sm:$0xff]
    %v1016 = vld [vmem:[#allocation7 + $0x20] sm:$0xff]
    %v1017 = vld [vmem:[#allocation7 + $0x28] sm:$0xff]
    %v1018 = vld [vmem:[#allocation7 + $0x30] sm:$0xff]
    %v1019 = vld [vmem:[#allocation7 + $0x38] sm:$0xff]
    %v1020 = vld [vmem:[#allocation7 + $0x40] sm:$0xff]
    %v1021 = vld [vmem:[#allocation7 + $0x48] sm:$0xff]
    %v1022 = vld [vmem:[#allocation7 + $0x50] sm:$0xff]
    %v1023 = vld [vmem:[#allocation7 + $0x58] sm:$0xff]
    %v1024 = vld [vmem:[#allocation7 + $0x60] sm:$0xff]
    %v1025 = vld [vmem:[#allocation7 + $0x68] sm:$0xff]
    %v1026 = vld [vmem:[#allocation7 + $0x70] sm:$0xff]
    %v1027 = vld [vmem:[#allocation7 + $0x78] sm:$0xff]
    %v1028 = vld [vmem:[#allocation7 + $0x80] sm:$0xff]
    %v1029 = vld [vmem:[#allocation7 + $0x88] sm:$0xff]
    %v1030 = vld [vmem:[#allocation7 + $0x90] sm:$0xff]
    %v1031 = vld [vmem:[#allocation7 + $0x98] sm:$0xff]
    %v1032 = vld [vmem:[#allocation7 + $0xa0] sm:$0xff]
    %v1033 = vld [vmem:[#allocation7 + $0xa8] sm:$0xff]
    %v1034 = vld [vmem:[#allocation7 + $0xb0] sm:$0xff]
    %v1035 = vld [vmem:[#allocation7 + $0xb8] sm:$0xff]
    %v1036 = vld [vmem:[#allocation7 + $0xc0] sm:$0xff]
    %v1037 = vld [vmem:[#allocation7 + $0xc8] sm:$0xff]
    %v1038 = vld [vmem:[#allocation7 + $0xd0] sm:$0xff]
    %v1039 = vld [vmem:[#allocation7 + $0xd8] sm:$0xff]
    %v1040 = vld [vmem:[#allocation7 + $0xe0] sm:$0xff]
    %v1041 = vld [vmem:[#allocation7 + $0xe8] sm:$0xff]
    %v1042 = vld [vmem:[#allocation7 + $0xf0] sm:$0xff]
    %v1043 = vld [vmem:[#allocation7 + $0xf8] sm:$0xff]
    %v1045 = vlaneseq
    %v1046 = vshrl.u32 %v1045, 7
    %v1047 = vsub.s32 0, %v1046
    %v1048 = vrot.slane %v81, %v1047
    %v1049 = vlaneseq
    %v1050 = vshrl.u32 %v1049, 7
    %v1051 = vsub.s32 1, %v1050
    %v1052 = vrot.slane %v81, %v1051
    %v1087 = vunpack.c.l.b16 %v1012
    %v1088 = vunpack.c.h.b16 %v1012
    %v1089 = vunpack.c.l.b16 %v1013
    %v1090 = vunpack.c.h.b16 %v1013
    %v1091 = vunpack.c.l.b16 %v1014
    %v1092 = vunpack.c.h.b16 %v1014
    %v1093 = vunpack.c.l.b16 %v1015
    %v1094 = vunpack.c.h.b16 %v1015
    %v1095 = vunpack.c.l.b16 %v1016
    %v1096 = vunpack.c.h.b16 %v1016
    %v1097 = vunpack.c.l.b16 %v1017
    %v1098 = vunpack.c.h.b16 %v1017
    %v1099 = vunpack.c.l.b16 %v1018
    %v1100 = vunpack.c.h.b16 %v1018
    %v1101 = vunpack.c.l.b16 %v1019
    %v1102 = vunpack.c.h.b16 %v1019
    %v1103 = vunpack.c.l.b16 %v1020
    %v1104 = vunpack.c.h.b16 %v1020
    %v1105 = vunpack.c.l.b16 %v1021
    %v1106 = vunpack.c.h.b16 %v1021
    %v1107 = vunpack.c.l.b16 %v1022
    %v1108 = vunpack.c.h.b16 %v1022
    %v1109 = vunpack.c.l.b16 %v1023
    %v1110 = vunpack.c.h.b16 %v1023
    %v1111 = vunpack.c.l.b16 %v1024
    %v1112 = vunpack.c.h.b16 %v1024
    %v1113 = vunpack.c.l.b16 %v1025
    %v1114 = vunpack.c.h.b16 %v1025
    %v1115 = vunpack.c.l.b16 %v1026
    %v1116 = vunpack.c.h.b16 %v1026
    %v1117 = vunpack.c.l.b16 %v1027
    %v1118 = vunpack.c.h.b16 %v1027
    %v1119 = vunpack.c.l.b16 %v1028
    %v1120 = vunpack.c.h.b16 %v1028
    %v1121 = vunpack.c.l.b16 %v1029
    %v1122 = vunpack.c.h.b16 %v1029
    %v1123 = vunpack.c.l.b16 %v1030
    %v1124 = vunpack.c.h.b16 %v1030
    %v1125 = vunpack.c.l.b16 %v1031
    %v1126 = vunpack.c.h.b16 %v1031
    %v1127 = vunpack.c.l.b16 %v1032
    %v1128 = vunpack.c.h.b16 %v1032
    %v1129 = vunpack.c.l.b16 %v1033
    %v1130 = vunpack.c.h.b16 %v1033
    %v1131 = vunpack.c.l.b16 %v1034
    %v1132 = vunpack.c.h.b16 %v1034
    %v1133 = vunpack.c.l.b16 %v1035
    %v1134 = vunpack.c.h.b16 %v1035
    %v1135 = vunpack.c.l.b16 %v1036
    %v1136 = vunpack.c.h.b16 %v1036
    %v1137 = vunpack.c.l.b16 %v1037
    %v1138 = vunpack.c.h.b16 %v1037
    %v1139 = vunpack.c.l.b16 %v1038
    %v1140 = vunpack.c.h.b16 %v1038
    %v1141 = vunpack.c.l.b16 %v1039
    %v1142 = vunpack.c.h.b16 %v1039
    %v1143 = vunpack.c.l.b16 %v1040
    %v1144 = vunpack.c.h.b16 %v1040
    %v1145 = vunpack.c.l.b16 %v1041
    %v1146 = vunpack.c.h.b16 %v1041
    %v1147 = vunpack.c.l.b16 %v1042
    %v1148 = vunpack.c.h.b16 %v1042
    %v1149 = vunpack.c.l.b16 %v1043
    %v1150 = vunpack.c.h.b16 %v1043
    %v1151 = vpack.c.b16 %v1089, %v1087
    %v1152 = vpack.c.b16 %v1090, %v1088
    %v1153 = vpack.c.b16 %v1093, %v1091
    %v1154 = vpack.c.b16 %v1094, %v1092
    %v1155 = vpack.c.b16 %v1097, %v1095
    %v1156 = vpack.c.b16 %v1098, %v1096
    %v1157 = vpack.c.b16 %v1101, %v1099
    %v1158 = vpack.c.b16 %v1102, %v1100
    %v1159 = vpack.c.b16 %v1105, %v1103
    %v1160 = vpack.c.b16 %v1106, %v1104
    %v1161 = vpack.c.b16 %v1109, %v1107
    %v1162 = vpack.c.b16 %v1110, %v1108
    %v1163 = vpack.c.b16 %v1113, %v1111
    %v1164 = vpack.c.b16 %v1114, %v1112
    %v1165 = vpack.c.b16 %v1117, %v1115
    %v1166 = vpack.c.b16 %v1118, %v1116
    %v1167 = vpack.c.b16 %v1121, %v1119
    %v1168 = vpack.c.b16 %v1122, %v1120
    %v1169 = vpack.c.b16 %v1125, %v1123
    %v1170 = vpack.c.b16 %v1126, %v1124
    %v1171 = vpack.c.b16 %v1129, %v1127
    %v1172 = vpack.c.b16 %v1130, %v1128
    %v1173 = vpack.c.b16 %v1133, %v1131
    %v1174 = vpack.c.b16 %v1134, %v1132
    %v1175 = vpack.c.b16 %v1137, %v1135
    %v1176 = vpack.c.b16 %v1138, %v1136
    %v1177 = vpack.c.b16 %v1141, %v1139
    %v1178 = vpack.c.b16 %v1142, %v1140
    %v1179 = vpack.c.b16 %v1145, %v1143
    %v1180 = vpack.c.b16 %v1146, %v1144
    %v1181 = vpack.c.b16 %v1149, %v1147
    %v1182 = vpack.c.b16 %v1150, %v1148
    %1215 = vmatprep.subr.bf16.mxu0 %v1166
    %1216 = vmatpush1.bf16.msra.mxu0 %v1165
    %1217 = vmatprep.subr.bf16.mxu0 %v1164
    %1218 = vmatpush1.bf16.msra.mxu0 %v1163
    %1219 = vmatprep.subr.bf16.mxu0 %v1162
    %1220 = vmatpush1.bf16.msra.mxu0 %v1161
    %1221 = vmatprep.subr.bf16.mxu0 %v1160
    %1222 = vmatpush1.bf16.msra.mxu0 %v1159
    %1223 = vmatprep.subr.bf16.mxu0 %v1158
    %1224 = vmatpush1.bf16.msra.mxu0 %v1157
    %1225 = vmatprep.subr.bf16.mxu0 %v1156
    %1226 = vmatpush1.bf16.msra.mxu0 %v1155
    %1227 = vmatprep.subr.bf16.mxu0 %v1154
    %1228 = vmatpush1.bf16.msra.mxu0 %v1153
    %1229 = vmatprep.subr.bf16.mxu0 %v1152
    %1230 = vmatpush1.bf16.msra.mxu0 %v1151
    %1231 = vmatprep.subr.bf16.mxu0 %v1182
    %1232 = vmatpush2.bf16.msra.mxu0 %v1181
    %1233 = vmatprep.subr.bf16.mxu0 %v1180
    %1234 = vmatpush2.bf16.msra.mxu0 %v1179
    %1235 = vmatprep.subr.bf16.mxu0 %v1178
    %1236 = vmatpush2.bf16.msra.mxu0 %v1177
    %1237 = vmatprep.subr.bf16.mxu0 %v1176
    %1238 = vmatpush2.bf16.msra.mxu0 %v1175
    %1239 = vmatprep.subr.bf16.mxu0 %v1174
    %1240 = vmatpush2.bf16.msra.mxu0 %v1173
    %1241 = vmatprep.subr.bf16.mxu0 %v1172
    %1242 = vmatpush2.bf16.msra.mxu0 %v1171
    %1243 = vmatprep.subr.bf16.mxu0 %v1170
    %1244 = vmatpush2.bf16.msra.mxu0 %v1169
    %1245 = vmatprep.subr.bf16.mxu0 %v1168
    %1246 = vmatpush2.bf16.msra.mxu0 %v1167
    %1247 = vmatprep.mubr.bf16.mxu0 %v997
    %1248 = vmatmul.mubr.bf16.gmra.mxu0 %v996
    %v1249 = vpop.f32.mrf.mxu0
    %v1250 = vadd.f32 %v1048, %v1249
    %v1251 = vpop.f32.mrf.mxu0
    %v1252 = vadd.f32 %v1052, %v1251
    %v1253 = vpop.f32.mrf.mxu0
    %v1254 = vadd.f32 %v1048, %v1253
    %v1255 = vpop.f32.mrf.mxu0
    %v1256 = vadd.f32 %v1052, %v1255
    %1257 = vmatprep.mubr.bf16.mxu0 %v999
    %1258 = vmatmul.mubr.bf16.gmra.mxu0 %v998
    %v1259 = vpop.f32.mrf.mxu0
    %v1260 = vadd.f32 %v1048, %v1259
    %v1261 = vpop.f32.mrf.mxu0
    %v1262 = vadd.f32 %v1052, %v1261
    %v1263 = vpop.f32.mrf.mxu0
    %v1264 = vadd.f32 %v1048, %v1263
    %v1265 = vpop.f32.mrf.mxu0
    %v1266 = vadd.f32 %v1052, %v1265
    %1267 = vmatprep.mubr.bf16.mxu0 %v1001
    %1268 = vmatmul.mubr.bf16.gmra.mxu0 %v1000
    %v1269 = vpop.f32.mrf.mxu0
    %v1270 = vadd.f32 %v1048, %v1269
    %v1271 = vpop.f32.mrf.mxu0
    %v1272 = vadd.f32 %v1052, %v1271
    %v1273 = vpop.f32.mrf.mxu0
    %v1274 = vadd.f32 %v1048, %v1273
    %v1275 = vpop.f32.mrf.mxu0
    %v1276 = vadd.f32 %v1052, %v1275
    %1277 = vmatprep.mubr.bf16.mxu0 %v1003
    %1278 = vmatmul.mubr.bf16.gmra.mxu0 %v1002
    %v1279 = vpop.f32.mrf.mxu0
    %v1280 = vadd.f32 %v1048, %v1279
    %v1281 = vpop.f32.mrf.mxu0
    %v1282 = vadd.f32 %v1052, %v1281
    %v1283 = vpop.f32.mrf.mxu0
    %v1284 = vadd.f32 %v1048, %v1283
    %v1285 = vpop.f32.mrf.mxu0
    %v1286 = vadd.f32 %v1052, %v1285
    %1287 = vmatprep.mubr.bf16.mxu0 %v1005
    %1288 = vmatmul.mubr.bf16.gmra.mxu0 %v1004
    %v1289 = vpop.f32.mrf.mxu0
    %v1290 = vadd.f32 %v1048, %v1289
    %v1291 = vpop.f32.mrf.mxu0
    %v1292 = vadd.f32 %v1052, %v1291
    %v1293 = vpop.f32.mrf.mxu0
    %v1294 = vadd.f32 %v1048, %v1293
    %v1295 = vpop.f32.mrf.mxu0
    %v1296 = vadd.f32 %v1052, %v1295
    %1297 = vmatprep.mubr.bf16.mxu0 %v1007
    %1298 = vmatmul.mubr.bf16.gmra.mxu0 %v1006
    %v1299 = vpop.f32.mrf.mxu0
    %v1300 = vadd.f32 %v1048, %v1299
    %v1301 = vpop.f32.mrf.mxu0
    %v1302 = vadd.f32 %v1052, %v1301
    %v1303 = vpop.f32.mrf.mxu0
    %v1304 = vadd.f32 %v1048, %v1303
    %v1305 = vpop.f32.mrf.mxu0
    %v1306 = vadd.f32 %v1052, %v1305
    %1307 = vmatprep.mubr.bf16.mxu0 %v1009
    %1308 = vmatmul.mubr.bf16.gmra.mxu0 %v1008
    %v1309 = vpop.f32.mrf.mxu0
    %v1310 = vadd.f32 %v1048, %v1309
    %v1311 = vpop.f32.mrf.mxu0
    %v1312 = vadd.f32 %v1052, %v1311
    %v1313 = vpop.f32.mrf.mxu0
    %v1314 = vadd.f32 %v1048, %v1313
    %v1315 = vpop.f32.mrf.mxu0
    %v1316 = vadd.f32 %v1052, %v1315
    %1317 = vmatprep.mubr.bf16.mxu0 %v1011
    %1318 = vmatmul.mubr.bf16.gmra.mxu0 %v1010
    %v1319 = vpop.f32.mrf.mxu0
    %v1320 = vadd.f32 %v1048, %v1319
    %v1321 = vpop.f32.mrf.mxu0
    %v1322 = vadd.f32 %v1052, %v1321
    %v1323 = vpop.f32.mrf.mxu0
    %v1324 = vadd.f32 %v1048, %v1323
    %v1325 = vpop.f32.mrf.mxu0
    %v1326 = vadd.f32 %v1052, %v1325
    %1327 = vdwg.mxu0
    %v1328 = vmax.f32 %v1252, -20.0
    %v1329 = vmax.f32 %v1256, -20.0
    %v1330 = vmax.f32 %v1262, -20.0
    %v1331 = vmax.f32 %v1266, -20.0
    %v1332 = vmax.f32 %v1272, -20.0
    %v1333 = vmax.f32 %v1276, -20.0
    %v1334 = vmax.f32 %v1282, -20.0
    %v1335 = vmax.f32 %v1286, -20.0
    %v1336 = vmax.f32 %v1292, -20.0
    %v1337 = vmax.f32 %v1296, -20.0
    %v1338 = vmax.f32 %v1302, -20.0
    %v1339 = vmax.f32 %v1306, -20.0
    %v1340 = vmax.f32 %v1312, -20.0
    %v1341 = vmax.f32 %v1316, -20.0
    %v1342 = vmax.f32 %v1322, -20.0
    %v1343 = vmax.f32 %v1326, -20.0
    %v1344 = vmin.f32 %v1328, 2.0
    %v1345 = vmin.f32 %v1329, 2.0
    %v1346 = vmin.f32 %v1330, 2.0
    %v1347 = vmin.f32 %v1331, 2.0
    %v1348 = vmin.f32 %v1332, 2.0
    %v1349 = vmin.f32 %v1333, 2.0
    %v1350 = vmin.f32 %v1334, 2.0
    %v1351 = vmin.f32 %v1335, 2.0
    %v1352 = vmin.f32 %v1336, 2.0
    %v1353 = vmin.f32 %v1337, 2.0
    %v1354 = vmin.f32 %v1338, 2.0
    %v1355 = vmin.f32 %v1339, 2.0
    %v1356 = vmin.f32 %v1340, 2.0
    %v1357 = vmin.f32 %v1341, 2.0
    %v1358 = vmin.f32 %v1342, 2.0
    %v1359 = vmin.f32 %v1343, 2.0
    %1360 = vst [vmem:[#allocation8] sm:$0xff] %v1250
    %1361 = vst [vmem:[#allocation8 + $0x8] sm:$0xff] %v1254
    %1362 = vst [vmem:[#allocation8 + $0x10] sm:$0xff] %v1260
    %1363 = vst [vmem:[#allocation8 + $0x18] sm:$0xff] %v1264
    %1364 = vst [vmem:[#allocation8 + $0x20] sm:$0xff] %v1270
    %1365 = vst [vmem:[#allocation8 + $0x28] sm:$0xff] %v1274
    %1366 = vst [vmem:[#allocation8 + $0x30] sm:$0xff] %v1280
    %1367 = vst [vmem:[#allocation8 + $0x38] sm:$0xff] %v1284
    %1368 = vst [vmem:[#allocation8 + $0x40] sm:$0xff] %v1290
    %1369 = vst [vmem:[#allocation8 + $0x48] sm:$0xff] %v1294
    %1370 = vst [vmem:[#allocation8 + $0x50] sm:$0xff] %v1300
    %1371 = vst [vmem:[#allocation8 + $0x58] sm:$0xff] %v1304
    %1372 = vst [vmem:[#allocation8 + $0x60] sm:$0xff] %v1310
    %1373 = vst [vmem:[#allocation8 + $0x68] sm:$0xff] %v1314
    %1374 = vst [vmem:[#allocation8 + $0x70] sm:$0xff] %v1320
    %1375 = vst [vmem:[#allocation8 + $0x78] sm:$0xff] %v1324
    %1376 = vst [vmem:[#allocation9] sm:$0xff] %v1344
    %1377 = vst [vmem:[#allocation9 + $0x8] sm:$0xff] %v1345
    %1378 = vst [vmem:[#allocation9 + $0x10] sm:$0xff] %v1346
    %1379 = vst [vmem:[#allocation9 + $0x18] sm:$0xff] %v1347
    %1380 = vst [vmem:[#allocation9 + $0x20] sm:$0xff] %v1348
    %1381 = vst [vmem:[#allocation9 + $0x28] sm:$0xff] %v1349
    %1382 = vst [vmem:[#allocation9 + $0x30] sm:$0xff] %v1350
    %1383 = vst [vmem:[#allocation9 + $0x38] sm:$0xff] %v1351
    %1384 = vst [vmem:[#allocation9 + $0x40] sm:$0xff] %v1352
    %1385 = vst [vmem:[#allocation9 + $0x48] sm:$0xff] %v1353
    %1386 = vst [vmem:[#allocation9 + $0x50] sm:$0xff] %v1354
    %1387 = vst [vmem:[#allocation9 + $0x58] sm:$0xff] %v1355
    %1388 = vst [vmem:[#allocation9 + $0x60] sm:$0xff] %v1356
    %1389 = vst [vmem:[#allocation9 + $0x68] sm:$0xff] %v1357
    %1390 = vst [vmem:[#allocation9 + $0x70] sm:$0xff] %v1358
    %1391 = vst [vmem:[#allocation9 + $0x78] sm:$0xff] %v1359
    // Predicated region
    $region50: #{tpu_custom_call.1} parent=1 // pred_check
      _
    $region51: #{tpu_custom_call.1} parent=1 // pred_check_branch
      %1393 = sbr.rel (0) target = $region53
    $region52: #{tpu_custom_call.1} parent=1 // pred_region
      %s1395 = ssub.s32 2048, 2048
      %1396 = vsyncadd [#allocation4], %s1395
      %s1397 = sshll.u32 [#allocation8], 4
      %s1398 = int_to_ptr.vmem [resolvable:$true] %s1397
      %1403 = dma.vmem_to_hbm [thread:$0]  %s1398, 2048, %s9, [#allocation4], 128, 128, 8
    $region53: #{tpu_custom_call.1} parent=1 // pred_fallthru
      _
    // Predicated region
    $region54: #{tpu_custom_call.1} parent=1 // pred_check
      _
    $region55: #{tpu_custom_call.1} parent=1 // pred_check_branch
      %1405 = sbr.rel (0) target = $region57
    $region56: #{tpu_custom_call.1} parent=1 // pred_region
      %s1407 = ssub.s32 2048, 2048
      %1408 = vsyncadd [#allocation10], %s1407
      %s1409 = sshll.u32 [#allocation9], 4
      %s1410 = int_to_ptr.vmem [resolvable:$true] %s1409
      %1415 = dma.vmem_to_hbm [thread:$0]  %s1410, 2048, %s10, [#allocation10], 128, 128, 8
    $region57: #{tpu_custom_call.1} parent=1 // pred_fallthru
      _
    // Predicated region
    $region58: #{tpu_custom_call.1} parent=1 // pred_check
      _
    $region59: #{tpu_custom_call.1} parent=1 // pred_check_branch
      %1417 = sbr.rel (0) target = $region61
    $region60: #{tpu_custom_call.1} parent=1 // pred_region
      %1418 = dma.done [#allocation4], 2048
    $region61: #{tpu_custom_call.1} parent=1 // pred_fallthru
      _
    // Predicated region
    $region62: #{tpu_custom_call.1} parent=1 // pred_check
      _
    $region63: #{tpu_custom_call.1} parent=1 // pred_check_branch
      %1420 = sbr.rel (0) target = $region65
    $region64: #{tpu_custom_call.1} parent=1 // pred_region
      %1421 = dma.done [#allocation10], 2048
    $region65: #{tpu_custom_call.1} parent=1 // pred_fallthru
      _
    %1422 = vsyncpa [#allocation3], 1
    %1423 = vsyncpa [#allocation6], 1
    %1424 = vsyncpa [#allocation4], 1
    %1425 = vsyncpa [#allocation10], 1

</llo_original>
